<compile_context>
chip_gen: v5e
topology: v5e:2x2
jax: 0.10.0
libtpu: 0.0.40
codegen_flags: <defaults>
</compile_context>

<pallas_src>
import functools

import jax
import jax.numpy as jnp
from jax.experimental import pallas as pl
from jax.experimental.pallas import tpu as pltpu


LANE = 128        # lane width (output feature padding)
SUBLANE_BF16 = 16 # bf16 sublane packing for the batch tile
MAX_TB = 512      # max batch-tile rows (safe VMEM on v5e/v6e/v7x)


def qnetwork_kernel(x_ref, w1_ref, b1_ref, w2_ref, b2_ref, w3_ref, b3_ref, out_ref):
    # x already bf16 from the wrapper; accumulate every matmul in f32.

    # Layer 1: Linear(input_dims, 512) + ReLU    (DQNBase "conv")
    h1 = jnp.dot(x_ref[...], w1_ref[...], preferred_element_type=jnp.float32)
    h1 = jnp.maximum(h1 + b1_ref[...], 0.0).astype(jnp.bfloat16)

    # Flatten is a no-op for (TB, 512) activations.

    # Layer 2: Linear(512, 512) + ReLU           (head[0], head[1])
    h2 = jnp.dot(h1, w2_ref[...], preferred_element_type=jnp.float32)
    h2 = jnp.maximum(h2 + b2_ref[...], 0.0).astype(jnp.bfloat16)

    # Layer 3: Linear(512, num_actions_p)        (head[2])
    q = jnp.dot(h2, w3_ref[...], preferred_element_type=jnp.float32)
    out_ref[...] = (q + b3_ref[...]).astype(out_ref.dtype)


def _round_up(n, m):
    return ((n + m - 1) // m) * m


def _cdiv(a, b):
    return (a + b - 1) // b


def prepare_qnetwork_params(w1, b1, w2, b2, w3, b3):
    """Pad/cast weights ONCE (hoisted out of the jitted per-call forward).

    Weights are (in, out); biases (out,) or (1, out). Returns a params tuple
    to pass to `qnetwork_forward`, plus the true num_actions.
    """
    H = w1.shape[1]
    A = w3.shape[1]
    A_p = _round_up(max(A, LANE), LANE)

    w1_b = w1.astype(jnp.bfloat16)                        # (Din, 512), unpadded K
    w2_b = w2.astype(jnp.bfloat16)                        # (512, 512)
    w3_p = jnp.zeros((H, A_p), jnp.bfloat16).at[:, :A].set(
        w3.astype(jnp.bfloat16))                          # lane-dense output
    b1_2d = jnp.asarray(b1, jnp.float32).reshape(1, H)
    b2_2d = jnp.asarray(b2, jnp.float32).reshape(1, H)
    b3_p = jnp.zeros((1, A_p), jnp.float32).at[:, :A].set(
        jnp.asarray(b3, jnp.float32).reshape(1, A))
    return (w1_b, b1_2d, w2_b, b2_2d, w3_p, b3_p), A


@functools.partial(jax.jit, static_argnames=("num_actions",))
def qnetwork_forward(x, params, num_actions):
    """x: (B, input_dims) f32; params from prepare_qnetwork_params."""
    w1_b, b1_2d, w2_b, b2_2d, w3_p, b3_p = params
    B, Din = x.shape
    H = w1_b.shape[1]
    A_p = w3_p.shape[1]

    # ---- adaptive batch tiling (minimal padding, >=2 steps for v7x) --------
    if B > 128:
        num_tiles = max(2, _cdiv(B, MAX_TB))   # 2 TCs on v7x share the grid
    else:
        num_tiles = 1
    TB = _round_up(_cdiv(B, num_tiles), SUBLANE_BF16)
    B_p = num_tiles * TB

    # ---- pad batch rows + cast to bf16 (single wrapper pass over x) --------
    if B_p == B:
        x_b = x.astype(jnp.bfloat16)
    else:
        x_b = jnp.zeros((B_p, Din), jnp.bfloat16).at[:B, :].set(
            x.astype(jnp.bfloat16))

    flops = 2 * B_p * (Din * H + H * H + H * A_p)
    bytes_accessed = (
        B_p * Din * 2                                    # x (bf16)
        + (w1_b.size + w2_b.size + w3_p.size) * 2        # bf16 weights
        + (b1_2d.size + b2_2d.size + b3_p.size) * 4      # f32 biases
        + B_p * A_p * 4                                  # f32 output
    )

    out_p = pl.pallas_call(
        qnetwork_kernel,
        out_shape=jax.ShapeDtypeStruct((B_p, A_p), jnp.float32),
        grid_spec=pltpu.PrefetchScalarGridSpec(
            num_scalar_prefetch=0,
            grid=(num_tiles,),
            in_specs=[
                # x: tiled over the batch grid axis, Din kept full-extent.
                pl.BlockSpec((TB, Din), lambda i: (i, 0)),
                # Weights / biases: full arrays, constant index_map =>
                # VMEM-resident across grid steps (no re-DMA).
                pl.BlockSpec((Din, H), lambda i: (0, 0)),
                pl.BlockSpec((1, H), lambda i: (0, 0)),
                pl.BlockSpec((H, H), lambda i: (0, 0)),
                pl.BlockSpec((1, H), lambda i: (0, 0)),
                pl.BlockSpec((H, A_p), lambda i: (0, 0)),
                pl.BlockSpec((1, A_p), lambda i: (0, 0)),
            ],
            out_specs=pl.BlockSpec((TB, A_p), lambda i: (i, 0)),
        ),
        compiler_params=pltpu.CompilerParams(
            dimension_semantics=("parallel",),
        ),
        cost_estimate=pl.CostEstimate(
            flops=flops, transcendentals=0, bytes_accessed=bytes_accessed),
    )(x_b, w1_b, b1_2d, w2_b, b2_2d, w3_p, b3_p)

    # Slice padded batch rows and padded action lanes back off.
    return out_p[:B, :num_actions]


def kaiming_uniform(key, shape_out_in):
    """Matches initialize_weights_he: kaiming_uniform_ (a=0, fan_in)."""
    fan_in = shape_out_in[1]
    bound = jnp.sqrt(6.0 / fan_in)
    return jax.random.uniform(
        key, shape_out_in, dtype=jnp.float32, minval=-bound, maxval=bound
    )


def _ref_bf16(x, w1, b1, w2, b2, w3, b3):
    """Pure-JAX reference matching the kernel's bf16-in / f32-accum math."""
    xb = x.astype(jnp.bfloat16)
    h1 = jnp.maximum(
        jnp.dot(xb, w1.astype(jnp.bfloat16),
                preferred_element_type=jnp.float32) + b1, 0.0
    ).astype(jnp.bfloat16)
    h2 = jnp.maximum(
        jnp.dot(h1, w2.astype(jnp.bfloat16),
                preferred_element_type=jnp.float32) + b2, 0.0
    ).astype(jnp.bfloat16)
    return jnp.dot(h2, w3.astype(jnp.bfloat16),
                   preferred_element_type=jnp.float32) + b3


if __name__ == "__main__":
    # Small, shape-consistent example (flat-state SAC-Discrete QNetwork).
    batch = 4
    input_dims = 32
    hidden = 512
    num_actions = 8

    key = jax.random.PRNGKey(0)
    k_x, k_x2, k_w1, k_w2, k_w3 = jax.random.split(key, 5)

    # Deterministic parameter init (PyTorch layout: (out, in)), biases = 0.
    w1_t = kaiming_uniform(k_w1, (hidden, input_dims))
    w2_t = kaiming_uniform(k_w2, (hidden, hidden))
    w3_t = kaiming_uniform(k_w3, (num_actions, hidden))
    b1 = jnp.zeros((hidden,), jnp.float32)
    b2 = jnp.zeros((hidden,), jnp.float32)
    b3 = jnp.zeros((num_actions,), jnp.float32)

    # Kernel layout: (in, out)
    w1 = w1_t.T
    w2 = w2_t.T
    w3 = w3_t.T

    # Weight prep hoisted out of the per-call path (done once).
    params, n_act = prepare_qnetwork_params(w1, b1, w2, b2, w3, b3)
    params = jax.tree_util.tree_map(jax.block_until_ready, params)

    # --- small batch (single tile) -----------------------------------------
    x = jax.random.normal(k_x, (batch, input_dims), dtype=jnp.float32)
    q = jax.block_until_ready(qnetwork_forward(x, params, num_actions=n_act))
    assert q.shape == (batch, num_actions)

    q_ref_bf16 = _ref_bf16(x, w1, b1.reshape(1, -1), w2, b2.reshape(1, -1),
                           w3, b3.reshape(1, -1))
    assert jnp.allclose(q, q_ref_bf16, atol=2e-2, rtol=2e-2)

    # f32 reference sanity check (bf16 weights => looser tolerance).
    h1_f = jnp.maximum(x @ w1 + b1.reshape(1, -1), 0.0)
    h2_f = jnp.maximum(h1_f @ w2 + b2.reshape(1, -1), 0.0)
    q_ref_f32 = h2_f @ w3 + b3.reshape(1, -1)
    assert jnp.allclose(q, q_ref_f32, atol=1e-1, rtol=1e-1)

    # --- larger batch (exercises adaptive 2-step grid + minimal padding) ---
    batch2 = 300
    x2 = jax.random.normal(k_x2, (batch2, input_dims), dtype=jnp.float32)
    q2 = jax.block_until_ready(qnetwork_forward(x2, params, num_actions=n_act))
    assert q2.shape == (batch2, num_actions)
    q2_ref = _ref_bf16(x2, w1, b1.reshape(1, -1), w2, b2.reshape(1, -1),
                       w3, b3.reshape(1, -1))
    assert jnp.allclose(q2, q2_ref, atol=2e-2, rtol=2e-2)

    print("KERNEL_OK")
</pallas_src>

<mosaic_0001>
module attributes {stable_mosaic.version = 11 : i64} {
  func.func @qnetwork_kernel(%arg0: i32, %arg1: memref<16x32xbf16, #tpu.memory_space<vmem>>, %arg2: memref<32x512xbf16, #tpu.memory_space<vmem>>, %arg3: memref<1x512xf32, #tpu.memory_space<vmem>>, %arg4: memref<512x512xbf16, #tpu.memory_space<vmem>>, %arg5: memref<1x512xf32, #tpu.memory_space<vmem>>, %arg6: memref<512x128xbf16, #tpu.memory_space<vmem>>, %arg7: memref<1x128xf32, #tpu.memory_space<vmem>>, %arg8: memref<16x128xf32, #tpu.memory_space<vmem>>) attributes {dimension_semantics = [#tpu.dimension_semantics<parallel>], iteration_bounds = array<i64: 1>, scalar_prefetch = 0 : i64, scratch_operands = 0 : i64, tpu.core_type = #tpu.core_type<tc>, window_params = [{transform_indices = @transform_0, window_bounds = array<i64: 16, 32>}, {pipeline_mode = #tpu.pipeline_mode<synchronous>, transform_indices = @transform_1, window_bounds = array<i64: 32, 512>}, {pipeline_mode = #tpu.pipeline_mode<synchronous>, transform_indices = @transform_2, window_bounds = array<i64: 1, 512>}, {pipeline_mode = #tpu.pipeline_mode<synchronous>, transform_indices = @transform_3, window_bounds = array<i64: 512, 512>}, {pipeline_mode = #tpu.pipeline_mode<synchronous>, transform_indices = @transform_4, window_bounds = array<i64: 1, 512>}, {pipeline_mode = #tpu.pipeline_mode<synchronous>, transform_indices = @transform_5, window_bounds = array<i64: 512, 128>}, {pipeline_mode = #tpu.pipeline_mode<synchronous>, transform_indices = @transform_6, window_bounds = array<i64: 1, 128>}, {transform_indices = @transform_7, window_bounds = array<i64: 16, 128>}]} {
    %c0 = arith.constant 0 : index
    %c0_0 = arith.constant 0 : index
    %0 = vector.load %arg1[%c0, %c0_0] : memref<16x32xbf16, #tpu.memory_space<vmem>>, vector<16x32xbf16>
    %c0_1 = arith.constant 0 : index
    %c0_2 = arith.constant 0 : index
    %1 = vector.load %arg2[%c0_1, %c0_2] : memref<32x512xbf16, #tpu.memory_space<vmem>>, vector<32x512xbf16>
    %cst = arith.constant dense<0.000000e+00> : vector<16x512xf32>
    %2 = tpu.matmul %0, %1, %cst {dimension_numbers = #tpu.dot_dimension_numbers<[1], [0], [0], [1], [0, 0, 1, 1], [], []>} : vector<16x32xbf16>, vector<32x512xbf16>, vector<16x512xf32> -> vector<16x512xf32>
    %c0_3 = arith.constant 0 : index
    %c0_4 = arith.constant 0 : index
    %3 = vector.load %arg3[%c0_3, %c0_4] : memref<1x512xf32, #tpu.memory_space<vmem>>, vector<1x512xf32>
    %4 = vector.broadcast %3 : vector<1x512xf32> to vector<16x512xf32>
    %5 = arith.addf %2, %4 : vector<16x512xf32>
    %cst_5 = arith.constant 0.000000e+00 : f32
    %6 = vector.broadcast %cst_5 : f32 to vector<16x512xf32>
    %7 = arith.maximumf %5, %6 : vector<16x512xf32>
    %8 = arith.truncf %7 : vector<16x512xf32> to vector<16x512xbf16>
    %c0_6 = arith.constant 0 : index
    %c0_7 = arith.constant 0 : index
    %9 = vector.load %arg4[%c0_6, %c0_7] : memref<512x512xbf16, #tpu.memory_space<vmem>>, vector<512x512xbf16>
    %cst_8 = arith.constant dense<0.000000e+00> : vector<16x512xf32>
    %10 = tpu.matmul %8, %9, %cst_8 {dimension_numbers = #tpu.dot_dimension_numbers<[1], [0], [0], [1], [0, 0, 1, 1], [], []>} : vector<16x512xbf16>, vector<512x512xbf16>, vector<16x512xf32> -> vector<16x512xf32>
    %c0_9 = arith.constant 0 : index
    %c0_10 = arith.constant 0 : index
    %11 = vector.load %arg5[%c0_9, %c0_10] : memref<1x512xf32, #tpu.memory_space<vmem>>, vector<1x512xf32>
    %12 = vector.broadcast %11 : vector<1x512xf32> to vector<16x512xf32>
    %13 = arith.addf %10, %12 : vector<16x512xf32>
    %cst_11 = arith.constant 0.000000e+00 : f32
    %14 = vector.broadcast %cst_11 : f32 to vector<16x512xf32>
    %15 = arith.maximumf %13, %14 : vector<16x512xf32>
    %16 = arith.truncf %15 : vector<16x512xf32> to vector<16x512xbf16>
    %c0_12 = arith.constant 0 : index
    %c0_13 = arith.constant 0 : index
    %17 = vector.load %arg6[%c0_12, %c0_13] : memref<512x128xbf16, #tpu.memory_space<vmem>>, vector<512x128xbf16>
    %cst_14 = arith.constant dense<0.000000e+00> : vector<16x128xf32>
    %18 = tpu.matmul %16, %17, %cst_14 {dimension_numbers = #tpu.dot_dimension_numbers<[1], [0], [0], [1], [0, 0, 1, 1], [], []>} : vector<16x512xbf16>, vector<512x128xbf16>, vector<16x128xf32> -> vector<16x128xf32>
    %c0_15 = arith.constant 0 : index
    %c0_16 = arith.constant 0 : index
    %19 = vector.load %arg7[%c0_15, %c0_16] : memref<1x128xf32, #tpu.memory_space<vmem>>, vector<1x128xf32>
    %20 = vector.broadcast %19 : vector<1x128xf32> to vector<16x128xf32>
    %21 = arith.addf %18, %20 : vector<16x128xf32>
    %c0_17 = arith.constant 0 : index
    %c0_18 = arith.constant 0 : index
    %22 = vector.load %arg8[%c0_17, %c0_18] : memref<16x128xf32, #tpu.memory_space<vmem>>, vector<16x128xf32>
    tpu.vector_store %arg8[%c0_17, %c0_18], %21 {strides = array<i32>} : memref<16x128xf32, #tpu.memory_space<vmem>>, vector<16x128xf32>,
    return
  }
  func.func @transform_0(%arg0: i32) -> (i32, i32) {
    %c0_i32 = arith.constant 0 : i32
    %c0_i32_0 = arith.constant 0 : i32
    return %arg0, %c0_i32 : i32, i32
  }
  func.func @transform_1(%arg0: i32) -> (i32, i32) {
    %c0_i32 = arith.constant 0 : i32
    %c0_i32_0 = arith.constant 0 : i32
    %c0_i32_1 = arith.constant 0 : i32
    return %c0_i32, %c0_i32_0 : i32, i32
  }
  func.func @transform_2(%arg0: i32) -> (i32, i32) {
    %c0_i32 = arith.constant 0 : i32
    %c0_i32_0 = arith.constant 0 : i32
    %c0_i32_1 = arith.constant 0 : i32
    return %c0_i32, %c0_i32_0 : i32, i32
  }
  func.func @transform_3(%arg0: i32) -> (i32, i32) {
    %c0_i32 = arith.constant 0 : i32
    %c0_i32_0 = arith.constant 0 : i32
    %c0_i32_1 = arith.constant 0 : i32
    return %c0_i32, %c0_i32_0 : i32, i32
  }
  func.func @transform_4(%arg0: i32) -> (i32, i32) {
    %c0_i32 = arith.constant 0 : i32
    %c0_i32_0 = arith.constant 0 : i32
    %c0_i32_1 = arith.constant 0 : i32
    return %c0_i32, %c0_i32_0 : i32, i32
  }
  func.func @transform_5(%arg0: i32) -> (i32, i32) {
    %c0_i32 = arith.constant 0 : i32
    %c0_i32_0 = arith.constant 0 : i32
    %c0_i32_1 = arith.constant 0 : i32
    return %c0_i32, %c0_i32_0 : i32, i32
  }
  func.func @transform_6(%arg0: i32) -> (i32, i32) {
    %c0_i32 = arith.constant 0 : i32
    %c0_i32_0 = arith.constant 0 : i32
    %c0_i32_1 = arith.constant 0 : i32
    return %c0_i32, %c0_i32_0 : i32, i32
  }
  func.func @transform_7(%arg0: i32) -> (i32, i32) {
    %c0_i32 = arith.constant 0 : i32
    %c0_i32_0 = arith.constant 0 : i32
    return %arg0, %c0_i32 : i32, i32
  }
}

</mosaic_0001>

<llo_original>
// kernel: qnetwork_forward.1
$region0: #{qnetwork_forward.1}
  #allocation0 [shape = 'u32[]', space=smem, size = 0x4, offset = 0x4, fixed_abs, tag = 'smem constant byte address 0x4 - core index']
  #allocation1 [shape = 'u32[72,128]{1,0:T(1,128)}', space=vmem, size = 0x9000, scoped, tag = 'internal scratch']
  %s0 = inlined_call_operand.vmem [shape: bf16[16,32], index: 0, kind: input, shape index: {}]
  %s1 = inlined_call_operand.hbm [shape: bf16[32,512], index: 1, kind: input, shape index: {}]
  %s2 = inlined_call_operand.vmem [shape: f32[1,512], index: 2, kind: input, shape index: {}]
  %s3 = inlined_call_operand.hbm [shape: bf16[512,512], index: 3, kind: input, shape index: {}]
  %s4 = inlined_call_operand.vmem [shape: f32[1,512], index: 4, kind: input, shape index: {}]
  %s5 = inlined_call_operand.hbm [shape: bf16[512,128], index: 5, kind: input, shape index: {}]
  %s6 = inlined_call_operand.vmem [shape: f32[1,128], index: 6, kind: input, shape index: {}]
  %s7 = inlined_call_operand.vmem [shape: f32[16,128], index: 7, kind: output, shape index: {}]
  %s8 = sld [smem:[#allocation0]]
  $region50: #{qnetwork_forward.1} parent=0
    _
  %s10 = ssub.s32 1, %s8
  %s11 = scalar_select 0, %s10, %s8
  $region1: #{qnetwork_forward.1} parent=0
    #allocation2 [shape = 'u8[32768]{0}', space=vmem, size = 0x8000, scoped, tag = 'input window, operand 1, single buffered']
    #allocation3 [shape = 's32[1]{0}', space=sflag, size = 0x4, scoped, tag = 'scoped memory for qnetwork_forward.1']
    #allocation4 [shape = 'u8[524288]{0}', space=vmem, size = 0x80000, scoped, tag = 'input window, operand 3, single buffered']
    #allocation5 [shape = 's32[1]{0}', space=sflag, size = 0x4, scoped, tag = 'scoped memory for qnetwork_forward.1']
    #allocation6 [shape = 'u8[131072]{0}', space=vmem, size = 0x20000, scoped, tag = 'input window, operand 5, single buffered']
    %12 = vsyncpa [#allocation3], 0
    %13 = vsyncpa [#allocation5], 0
    // Predicated region
    $region2: #{qnetwork_forward.1} parent=1 // pred_check
      _
    $region3: #{qnetwork_forward.1} parent=1 // pred_check_branch
      %15 = sbr.rel (0) target = $region5
    $region4: #{qnetwork_forward.1} parent=1 // pred_region
      _
    $region5: #{qnetwork_forward.1} parent=1 // pred_fallthru
      _
    // Predicated region
    $region6: #{qnetwork_forward.1} parent=1 // pred_check
      _
    $region7: #{qnetwork_forward.1} parent=1 // pred_check_branch
      %17 = sbr.rel (0) target = $region9
    $region8: #{qnetwork_forward.1} parent=1 // pred_region
      %19 = vsyncadd [#allocation3], 0
      %s20 = sshll.u32 %s1, 4
      %s21 = int_to_ptr.hbm [resolvable:$true] %s20
      %s22 = sshll.u32 [#allocation2], 4
      %s23 = int_to_ptr.vmem [resolvable:$true] %s22
      %28 = dma.hbm_to_vmem [thread:$0]  %s21, 1024, %s23, [#allocation3], 256, 256, 16
    $region9: #{qnetwork_forward.1} parent=1 // pred_fallthru
      _
    // Predicated region
    $region10: #{qnetwork_forward.1} parent=1 // pred_check
      _
    $region11: #{qnetwork_forward.1} parent=1 // pred_check_branch
      %30 = sbr.rel (0) target = $region13
    $region12: #{qnetwork_forward.1} parent=1 // pred_region
      _
    $region13: #{qnetwork_forward.1} parent=1 // pred_fallthru
      _
    // Predicated region
    $region14: #{qnetwork_forward.1} parent=1 // pred_check
      _
    $region15: #{qnetwork_forward.1} parent=1 // pred_check_branch
      %32 = sbr.rel (0) target = $region17
    $region16: #{qnetwork_forward.1} parent=1 // pred_region
      %34 = vsyncadd [#allocation5], 0
      %s35 = sshll.u32 %s3, 4
      %s36 = int_to_ptr.hbm [resolvable:$true] %s35
      %s37 = sshll.u32 [#allocation4], 4
      %s38 = int_to_ptr.vmem [resolvable:$true] %s37
      %43 = dma.hbm_to_vmem [thread:$0]  %s36, 16384, %s38, [#allocation5], 256, 256, 16
    $region17: #{qnetwork_forward.1} parent=1 // pred_fallthru
      _
    // Predicated region
    $region18: #{qnetwork_forward.1} parent=1 // pred_check
      _
    $region19: #{qnetwork_forward.1} parent=1 // pred_check_branch
      %45 = sbr.rel (0) target = $region21
    $region20: #{qnetwork_forward.1} parent=1 // pred_region
      _
    $region21: #{qnetwork_forward.1} parent=1 // pred_fallthru
      _
    // Predicated region
    $region22: #{qnetwork_forward.1} parent=1 // pred_check
      _
    $region23: #{qnetwork_forward.1} parent=1 // pred_check_branch
      %47 = sbr.rel (0) target = $region25
    $region24: #{qnetwork_forward.1} parent=1 // pred_region
      %49 = vsyncadd [#allocation5], 0
      %s50 = sshll.u32 %s5, 4
      %s51 = int_to_ptr.hbm [resolvable:$true] %s50
      %s52 = sshll.u32 [#allocation6], 4
      %s53 = int_to_ptr.vmem [resolvable:$true] %s52
      %58 = dma.hbm_to_vmem [thread:$0]  %s51, 4096, %s53, [#allocation5], 64, 64, 4
    $region25: #{qnetwork_forward.1} parent=1 // pred_fallthru
      _
    // Predicated region
    $region26: #{qnetwork_forward.1} parent=1 // pred_check
      _
    $region27: #{qnetwork_forward.1} parent=1 // pred_check_branch
      %60 = sbr.rel (0) target = $region29
    $region28: #{qnetwork_forward.1} parent=1 // pred_region
      _
    $region29: #{qnetwork_forward.1} parent=1 // pred_fallthru
      _
    // Predicated region
    $region30: #{qnetwork_forward.1} parent=1 // pred_check
      _
    $region31: #{qnetwork_forward.1} parent=1 // pred_check_branch
      %62 = sbr.rel (0) target = $region33
    $region32: #{qnetwork_forward.1} parent=1 // pred_region
      %64 = dma.done [#allocation3], 1024
    $region33: #{qnetwork_forward.1} parent=1 // pred_fallthru
      _
    // Predicated region
    $region34: #{qnetwork_forward.1} parent=1 // pred_check
      _
    $region35: #{qnetwork_forward.1} parent=1 // pred_check_branch
      %66 = sbr.rel (0) target = $region37
    $region36: #{qnetwork_forward.1} parent=1 // pred_region
      %68 = dma.done [#allocation5], 16384
    $region37: #{qnetwork_forward.1} parent=1 // pred_fallthru
      _
    // Predicated region
    $region38: #{qnetwork_forward.1} parent=1 // pred_check
      _
    $region39: #{qnetwork_forward.1} parent=1 // pred_check_branch
      %70 = sbr.rel (0) target = $region41
    $region40: #{qnetwork_forward.1} parent=1 // pred_region
      %72 = dma.done [#allocation5], 4096
    $region41: #{qnetwork_forward.1} parent=1 // pred_fallthru
      _
    %v74 = vld [vmem:[%s0] sm:$0xf]
    %v75 = vld [vmem:[%s0 + $0x4] sm:$0xf]
    %v76 = vld [vmem:[#allocation2] sm:$0xff]
    %v77 = vld [vmem:[#allocation2 + $0x8] sm:$0xff]
    %v78 = vld [vmem:[#allocation2 + $0x10] sm:$0xff]
    %v79 = vld [vmem:[#allocation2 + $0x18] sm:$0xff]
    %v80 = vld [vmem:[#allocation2 + $0x20] sm:$0xff]
    %v81 = vld [vmem:[#allocation2 + $0x28] sm:$0xff]
    %v82 = vld [vmem:[#allocation2 + $0x30] sm:$0xff]
    %v83 = vld [vmem:[#allocation2 + $0x38] sm:$0xff]
    %v84 = vld [vmem:[%s2] sm:$0xf]
    %v86 = vperm.slane %v84, 0
    %v87 = vperm.slane %v84, 1
    %v88 = vperm.slane %v84, 2
    %v89 = vperm.slane %v84, 3
    %v96 = vunpack.c.l.b16 %v74
    %v97 = vunpack.c.l.b16 %v75
    %v98 = vpack.c.b16 %v97, %v96
    %v107 = vunpack.c.l.b16 %v76
    %v108 = vunpack.c.h.b16 %v76
    %v109 = vunpack.c.l.b16 %v77
    %v110 = vunpack.c.h.b16 %v77
    %v111 = vunpack.c.l.b16 %v78
    %v112 = vunpack.c.h.b16 %v78
    %v113 = vunpack.c.l.b16 %v79
    %v114 = vunpack.c.h.b16 %v79
    %v115 = vunpack.c.l.b16 %v80
    %v116 = vunpack.c.h.b16 %v80
    %v117 = vunpack.c.l.b16 %v81
    %v118 = vunpack.c.h.b16 %v81
    %v119 = vunpack.c.l.b16 %v82
    %v120 = vunpack.c.h.b16 %v82
    %v121 = vunpack.c.l.b16 %v83
    %v122 = vunpack.c.h.b16 %v83
    %v123 = vpack.c.b16 %v111, %v107
    %v124 = vpack.c.b16 %v112, %v108
    %v125 = vpack.c.b16 %v113, %v109
    %v126 = vpack.c.b16 %v114, %v110
    %v127 = vpack.c.b16 %v119, %v115
    %v128 = vpack.c.b16 %v120, %v116
    %v129 = vpack.c.b16 %v121, %v117
    %v130 = vpack.c.b16 %v122, %v118
    %vm139 = vcmask 261120
    %v141 = vsel %vm139, %v98, 0
    %143 = vmatpush.bf16.msra.mxu0 0
    %144 = vmatpush.bf16.msra.mxu0 0
    %145 = vmatpush.bf16.msra.mxu0 0
    %146 = vmatpush.bf16.msra.mxu0 0
    %147 = vmatpush.bf16.msra.mxu0 0
    %148 = vmatpush.bf16.msra.mxu0 0
    %149 = vmatpush.bf16.msra.mxu0 %v127
    %150 = vmatpush.bf16.msra.mxu0 %v123
    %151 = vmatmul.bf16.gmra.mxu0 %v141
    %v152 = vpop.f32.mrf.mxu0
    %v153 = vadd.f32 %v86, %v152
    %v154 = vpop.f32.mrf.mxu0
    %v155 = vadd.f32 %v86, %v154
    %156 = vdwg.mxu0
    %157 = vmatpush.bf16.msra.mxu0 0
    %158 = vmatpush.bf16.msra.mxu0 0
    %159 = vmatpush.bf16.msra.mxu0 0
    %160 = vmatpush.bf16.msra.mxu0 0
    %161 = vmatpush.bf16.msra.mxu0 0
    %162 = vmatpush.bf16.msra.mxu0 0
    %163 = vmatpush.bf16.msra.mxu0 %v128
    %164 = vmatpush.bf16.msra.mxu0 %v124
    %165 = vmatmul.bf16.gmra.mxu0 %v141
    %v166 = vpop.f32.mrf.mxu0
    %v167 = vadd.f32 %v87, %v166
    %v168 = vpop.f32.mrf.mxu0
    %v169 = vadd.f32 %v87, %v168
    %170 = vdwg.mxu0
    %171 = vmatpush.bf16.msra.mxu0 0
    %172 = vmatpush.bf16.msra.mxu0 0
    %173 = vmatpush.bf16.msra.mxu0 0
    %174 = vmatpush.bf16.msra.mxu0 0
    %175 = vmatpush.bf16.msra.mxu0 0
    %176 = vmatpush.bf16.msra.mxu0 0
    %177 = vmatpush.bf16.msra.mxu0 %v129
    %178 = vmatpush.bf16.msra.mxu0 %v125
    %179 = vmatmul.bf16.gmra.mxu0 %v141
    %v180 = vpop.f32.mrf.mxu0
    %v181 = vadd.f32 %v88, %v180
    %v182 = vpop.f32.mrf.mxu0
    %v183 = vadd.f32 %v88, %v182
    %184 = vdwg.mxu0
    %185 = vmatpush.bf16.msra.mxu0 0
    %186 = vmatpush.bf16.msra.mxu0 0
    %187 = vmatpush.bf16.msra.mxu0 0
    %188 = vmatpush.bf16.msra.mxu0 0
    %189 = vmatpush.bf16.msra.mxu0 0
    %190 = vmatpush.bf16.msra.mxu0 0
    %191 = vmatpush.bf16.msra.mxu0 %v130
    %192 = vmatpush.bf16.msra.mxu0 %v126
    %193 = vmatmul.bf16.gmra.mxu0 %v141
    %v194 = vpop.f32.mrf.mxu0
    %v195 = vadd.f32 %v89, %v194
    %v196 = vpop.f32.mrf.mxu0
    %v197 = vadd.f32 %v89, %v196
    %198 = vdwg.mxu0
    %v199 = vmax.f32 %v153, 0.0
    %v200 = vmax.f32 %v167, 0.0
    %v201 = vmax.f32 %v181, 0.0
    %v202 = vmax.f32 %v195, 0.0
    %v203 = vmax.f32 %v155, 0.0
    %v204 = vmax.f32 %v169, 0.0
    %v205 = vmax.f32 %v183, 0.0
    %v206 = vmax.f32 %v197, 0.0
    %v207 = vpack.c.bf16 %v203, %v199
    %v208 = vpack.c.bf16 %v204, %v200
    %v209 = vpack.c.bf16 %v205, %v201
    %v210 = vpack.c.bf16 %v206, %v202
    %v211 = vld [vmem:[#allocation4] sm:$0xff]
    %v212 = vld [vmem:[#allocation4 + $0x8] sm:$0xff]
    %v213 = vld [vmem:[#allocation4 + $0x10] sm:$0xff]
    %v214 = vld [vmem:[#allocation4 + $0x18] sm:$0xff]
    %v215 = vld [vmem:[#allocation4 + $0x20] sm:$0xff]
    %v216 = vld [vmem:[#allocation4 + $0x28] sm:$0xff]
    %v217 = vld [vmem:[#allocation4 + $0x30] sm:$0xff]
    %v218 = vld [vmem:[#allocation4 + $0x38] sm:$0xff]
    %v219 = vld [vmem:[#allocation4 + $0x40] sm:$0xff]
    %v220 = vld [vmem:[#allocation4 + $0x48] sm:$0xff]
    %v221 = vld [vmem:[#allocation4 + $0x50] sm:$0xff]
    %v222 = vld [vmem:[#allocation4 + $0x58] sm:$0xff]
    %v223 = vld [vmem:[#allocation4 + $0x60] sm:$0xff]
    %v224 = vld [vmem:[#allocation4 + $0x68] sm:$0xff]
    %v225 = vld [vmem:[#allocation4 + $0x70] sm:$0xff]
    %v226 = vld [vmem:[#allocation4 + $0x78] sm:$0xff]
    %v227 = vld [vmem:[#allocation4 + $0x80] sm:$0xff]
    %v228 = vld [vmem:[#allocation4 + $0x88] sm:$0xff]
    %v229 = vld [vmem:[#allocation4 + $0x90] sm:$0xff]
    %v230 = vld [vmem:[#allocation4 + $0x98] sm:$0xff]
    %v231 = vld [vmem:[#allocation4 + $0xa0] sm:$0xff]
    %v232 = vld [vmem:[#allocation4 + $0xa8] sm:$0xff]
    %v233 = vld [vmem:[#allocation4 + $0xb0] sm:$0xff]
    %v234 = vld [vmem:[#allocation4 + $0xb8] sm:$0xff]
    %v235 = vld [vmem:[#allocation4 + $0xc0] sm:$0xff]
    %v236 = vld [vmem:[#allocation4 + $0xc8] sm:$0xff]
    %v237 = vld [vmem:[#allocation4 + $0xd0] sm:$0xff]
    %v238 = vld [vmem:[#allocation4 + $0xd8] sm:$0xff]
    %v239 = vld [vmem:[#allocation4 + $0xe0] sm:$0xff]
    %v240 = vld [vmem:[#allocation4 + $0xe8] sm:$0xff]
    %v241 = vld [vmem:[#allocation4 + $0xf0] sm:$0xff]
    %v242 = vld [vmem:[#allocation4 + $0xf8] sm:$0xff]
    %v243 = vld [vmem:[#allocation4 + $0x100] sm:$0xff]
    %v244 = vld [vmem:[#allocation4 + $0x108] sm:$0xff]
    %v245 = vld [vmem:[#allocation4 + $0x110] sm:$0xff]
    %v246 = vld [vmem:[#allocation4 + $0x118] sm:$0xff]
    %v247 = vld [vmem:[#allocation4 + $0x120] sm:$0xff]
    %v248 = vld [vmem:[#allocation4 + $0x128] sm:$0xff]
    %v249 = vld [vmem:[#allocation4 + $0x130] sm:$0xff]
    %v250 = vld [vmem:[#allocation4 + $0x138] sm:$0xff]
    %v251 = vld [vmem:[#allocation4 + $0x140] sm:$0xff]
    %v252 = vld [vmem:[#allocation4 + $0x148] sm:$0xff]
    %v253 = vld [vmem:[#allocation4 + $0x150] sm:$0xff]
    %v254 = vld [vmem:[#allocation4 + $0x158] sm:$0xff]
    %v255 = vld [vmem:[#allocation4 + $0x160] sm:$0xff]
    %v256 = vld [vmem:[#allocation4 + $0x168] sm:$0xff]
    %v257 = vld [vmem:[#allocation4 + $0x170] sm:$0xff]
    %v258 = vld [vmem:[#allocation4 + $0x178] sm:$0xff]
    %v259 = vld [vmem:[#allocation4 + $0x180] sm:$0xff]
    %v260 = vld [vmem:[#allocation4 + $0x188] sm:$0xff]
    %v261 = vld [vmem:[#allocation4 + $0x190] sm:$0xff]
    %v262 = vld [vmem:[#allocation4 + $0x198] sm:$0xff]
    %v263 = vld [vmem:[#allocation4 + $0x1a0] sm:$0xff]
    %v264 = vld [vmem:[#allocation4 + $0x1a8] sm:$0xff]
    %v265 = vld [vmem:[#allocation4 + $0x1b0] sm:$0xff]
    %v266 = vld [vmem:[#allocation4 + $0x1b8] sm:$0xff]
    %v267 = vld [vmem:[#allocation4 + $0x1c0] sm:$0xff]
    %v268 = vld [vmem:[#allocation4 + $0x1c8] sm:$0xff]
    %v269 = vld [vmem:[#allocation4 + $0x1d0] sm:$0xff]
    %v270 = vld [vmem:[#allocation4 + $0x1d8] sm:$0xff]
    %v271 = vld [vmem:[#allocation4 + $0x1e0] sm:$0xff]
    %v272 = vld [vmem:[#allocation4 + $0x1e8] sm:$0xff]
    %v273 = vld [vmem:[#allocation4 + $0x1f0] sm:$0xff]
    %v274 = vld [vmem:[#allocation4 + $0x1f8] sm:$0xff]
    %v275 = vld [vmem:[#allocation4 + $0x200] sm:$0xff]
    %v276 = vld [vmem:[#allocation4 + $0x208] sm:$0xff]
    %v277 = vld [vmem:[#allocation4 + $0x210] sm:$0xff]
    %v278 = vld [vmem:[#allocation4 + $0x218] sm:$0xff]
    %v279 = vld [vmem:[#allocation4 + $0x220] sm:$0xff]
    %v280 = vld [vmem:[#allocation4 + $0x228] sm:$0xff]
    %v281 = vld [vmem:[#allocation4 + $0x230] sm:$0xff]
    %v282 = vld [vmem:[#allocation4 + $0x238] sm:$0xff]
    %v283 = vld [vmem:[#allocation4 + $0x240] sm:$0xff]
    %v284 = vld [vmem:[#allocation4 + $0x248] sm:$0xff]
    %v285 = vld [vmem:[#allocation4 + $0x250] sm:$0xff]
    %v286 = vld [vmem:[#allocation4 + $0x258] sm:$0xff]
    %v287 = vld [vmem:[#allocation4 + $0x260] sm:$0xff]
    %v288 = vld [vmem:[#allocation4 + $0x268] sm:$0xff]
    %v289 = vld [vmem:[#allocation4 + $0x270] sm:$0xff]
    %v290 = vld [vmem:[#allocation4 + $0x278] sm:$0xff]
    %v291 = vld [vmem:[#allocation4 + $0x280] sm:$0xff]
    %v292 = vld [vmem:[#allocation4 + $0x288] sm:$0xff]
    %v293 = vld [vmem:[#allocation4 + $0x290] sm:$0xff]
    %v294 = vld [vmem:[#allocation4 + $0x298] sm:$0xff]
    %v295 = vld [vmem:[#allocation4 + $0x2a0] sm:$0xff]
    %v296 = vld [vmem:[#allocation4 + $0x2a8] sm:$0xff]
    %v297 = vld [vmem:[#allocation4 + $0x2b0] sm:$0xff]
    %v298 = vld [vmem:[#allocation4 + $0x2b8] sm:$0xff]
    %v299 = vld [vmem:[#allocation4 + $0x2c0] sm:$0xff]
    %v300 = vld [vmem:[#allocation4 + $0x2c8] sm:$0xff]
    %v301 = vld [vmem:[#allocation4 + $0x2d0] sm:$0xff]
    %v302 = vld [vmem:[#allocation4 + $0x2d8] sm:$0xff]
    %v303 = vld [vmem:[#allocation4 + $0x2e0] sm:$0xff]
    %v304 = vld [vmem:[#allocation4 + $0x2e8] sm:$0xff]
    %v305 = vld [vmem:[#allocation4 + $0x2f0] sm:$0xff]
    %v306 = vld [vmem:[#allocation4 + $0x2f8] sm:$0xff]
    %v307 = vld [vmem:[#allocation4 + $0x300] sm:$0xff]
    %v308 = vld [vmem:[#allocation4 + $0x308] sm:$0xff]
    %v309 = vld [vmem:[#allocation4 + $0x310] sm:$0xff]
    %v310 = vld [vmem:[#allocation4 + $0x318] sm:$0xff]
    %v311 = vld [vmem:[#allocation4 + $0x320] sm:$0xff]
    %v312 = vld [vmem:[#allocation4 + $0x328] sm:$0xff]
    %v313 = vld [vmem:[#allocation4 + $0x330] sm:$0xff]
    %v314 = vld [vmem:[#allocation4 + $0x338] sm:$0xff]
    %v315 = vld [vmem:[#allocation4 + $0x340] sm:$0xff]
    %v316 = vld [vmem:[#allocation4 + $0x348] sm:$0xff]
    %v317 = vld [vmem:[#allocation4 + $0x350] sm:$0xff]
    %v318 = vld [vmem:[#allocation4 + $0x358] sm:$0xff]
    %v319 = vld [vmem:[#allocation4 + $0x360] sm:$0xff]
    %v320 = vld [vmem:[#allocation4 + $0x368] sm:$0xff]
    %v321 = vld [vmem:[#allocation4 + $0x370] sm:$0xff]
    %v322 = vld [vmem:[#allocation4 + $0x378] sm:$0xff]
    %v323 = vld [vmem:[#allocation4 + $0x380] sm:$0xff]
    %v324 = vld [vmem:[#allocation4 + $0x388] sm:$0xff]
    %v325 = vld [vmem:[#allocation4 + $0x390] sm:$0xff]
    %v326 = vld [vmem:[#allocation4 + $0x398] sm:$0xff]
    %v327 = vld [vmem:[#allocation4 + $0x3a0] sm:$0xff]
    %v328 = vld [vmem:[#allocation4 + $0x3a8] sm:$0xff]
    %v329 = vld [vmem:[#allocation4 + $0x3b0] sm:$0xff]
    %v330 = vld [vmem:[#allocation4 + $0x3b8] sm:$0xff]
    %v331 = vld [vmem:[#allocation4 + $0x3c0] sm:$0xff]
    %v332 = vld [vmem:[#allocation4 + $0x3c8] sm:$0xff]
    %v333 = vld [vmem:[#allocation4 + $0x3d0] sm:$0xff]
    %v334 = vld [vmem:[#allocation4 + $0x3d8] sm:$0xff]
    %v335 = vld [vmem:[#allocation4 + $0x3e0] sm:$0xff]
    %v336 = vld [vmem:[#allocation4 + $0x3e8] sm:$0xff]
    %v337 = vld [vmem:[#allocation4 + $0x3f0] sm:$0xff]
    %v338 = vld [vmem:[#allocation4 + $0x3f8] sm:$0xff]
    %v339 = vld [vmem:[%s4] sm:$0xf]
    %v341 = vperm.slane %v339, 0
    %v342 = vperm.slane %v339, 1
    %v343 = vperm.slane %v339, 2
    %v344 = vperm.slane %v339, 3
    %v477 = vunpack.c.l.b16 %v211
    %v478 = vunpack.c.h.b16 %v211
    %v479 = vunpack.c.l.b16 %v212
    %v480 = vunpack.c.h.b16 %v212
    %v481 = vunpack.c.l.b16 %v213
    %v482 = vunpack.c.h.b16 %v213
    %v483 = vunpack.c.l.b16 %v214
    %v484 = vunpack.c.h.b16 %v214
    %v485 = vunpack.c.l.b16 %v215
    %v486 = vunpack.c.h.b16 %v215
    %v487 = vunpack.c.l.b16 %v216
    %v488 = vunpack.c.h.b16 %v216
    %v489 = vunpack.c.l.b16 %v217
    %v490 = vunpack.c.h.b16 %v217
    %v491 = vunpack.c.l.b16 %v218
    %v492 = vunpack.c.h.b16 %v218
    %v493 = vunpack.c.l.b16 %v219
    %v494 = vunpack.c.h.b16 %v219
    %v495 = vunpack.c.l.b16 %v220
    %v496 = vunpack.c.h.b16 %v220
    %v497 = vunpack.c.l.b16 %v221
    %v498 = vunpack.c.h.b16 %v221
    %v499 = vunpack.c.l.b16 %v222
    %v500 = vunpack.c.h.b16 %v222
    %v501 = vunpack.c.l.b16 %v223
    %v502 = vunpack.c.h.b16 %v223
    %v503 = vunpack.c.l.b16 %v224
    %v504 = vunpack.c.h.b16 %v224
    %v505 = vunpack.c.l.b16 %v225
    %v506 = vunpack.c.h.b16 %v225
    %v507 = vunpack.c.l.b16 %v226
    %v508 = vunpack.c.h.b16 %v226
    %v509 = vunpack.c.l.b16 %v227
    %v510 = vunpack.c.h.b16 %v227
    %v511 = vunpack.c.l.b16 %v228
    %v512 = vunpack.c.h.b16 %v228
    %v513 = vunpack.c.l.b16 %v229
    %v514 = vunpack.c.h.b16 %v229
    %v515 = vunpack.c.l.b16 %v230
    %v516 = vunpack.c.h.b16 %v230
    %v517 = vunpack.c.l.b16 %v231
    %v518 = vunpack.c.h.b16 %v231
    %v519 = vunpack.c.l.b16 %v232
    %v520 = vunpack.c.h.b16 %v232
    %v521 = vunpack.c.l.b16 %v233
    %v522 = vunpack.c.h.b16 %v233
    %v523 = vunpack.c.l.b16 %v234
    %v524 = vunpack.c.h.b16 %v234
    %v525 = vunpack.c.l.b16 %v235
    %v526 = vunpack.c.h.b16 %v235
    %v527 = vunpack.c.l.b16 %v236
    %v528 = vunpack.c.h.b16 %v236
    %v529 = vunpack.c.l.b16 %v237
    %v530 = vunpack.c.h.b16 %v237
    %v531 = vunpack.c.l.b16 %v238
    %v532 = vunpack.c.h.b16 %v238
    %v533 = vunpack.c.l.b16 %v239
    %v534 = vunpack.c.h.b16 %v239
    %v535 = vunpack.c.l.b16 %v240
    %v536 = vunpack.c.h.b16 %v240
    %v537 = vunpack.c.l.b16 %v241
    %v538 = vunpack.c.h.b16 %v241
    %v539 = vunpack.c.l.b16 %v242
    %v540 = vunpack.c.h.b16 %v242
    %v541 = vunpack.c.l.b16 %v243
    %v542 = vunpack.c.h.b16 %v243
    %v543 = vunpack.c.l.b16 %v244
    %v544 = vunpack.c.h.b16 %v244
    %v545 = vunpack.c.l.b16 %v245
    %v546 = vunpack.c.h.b16 %v245
    %v547 = vunpack.c.l.b16 %v246
    %v548 = vunpack.c.h.b16 %v246
    %v549 = vunpack.c.l.b16 %v247
    %v550 = vunpack.c.h.b16 %v247
    %v551 = vunpack.c.l.b16 %v248
    %v552 = vunpack.c.h.b16 %v248
    %v553 = vunpack.c.l.b16 %v249
    %v554 = vunpack.c.h.b16 %v249
    %v555 = vunpack.c.l.b16 %v250
    %v556 = vunpack.c.h.b16 %v250
    %v557 = vunpack.c.l.b16 %v251
    %v558 = vunpack.c.h.b16 %v251
    %v559 = vunpack.c.l.b16 %v252
    %v560 = vunpack.c.h.b16 %v252
    %v561 = vunpack.c.l.b16 %v253
    %v562 = vunpack.c.h.b16 %v253
    %v563 = vunpack.c.l.b16 %v254
    %v564 = vunpack.c.h.b16 %v254
    %v565 = vunpack.c.l.b16 %v255
    %v566 = vunpack.c.h.b16 %v255
    %v567 = vunpack.c.l.b16 %v256
    %v568 = vunpack.c.h.b16 %v256
    %v569 = vunpack.c.l.b16 %v257
    %v570 = vunpack.c.h.b16 %v257
    %v571 = vunpack.c.l.b16 %v258
    %v572 = vunpack.c.h.b16 %v258
    %v573 = vunpack.c.l.b16 %v259
    %v574 = vunpack.c.h.b16 %v259
    %v575 = vunpack.c.l.b16 %v260
    %v576 = vunpack.c.h.b16 %v260
    %v577 = vunpack.c.l.b16 %v261
    %v578 = vunpack.c.h.b16 %v261
    %v579 = vunpack.c.l.b16 %v262
    %v580 = vunpack.c.h.b16 %v262
    %v581 = vunpack.c.l.b16 %v263
    %v582 = vunpack.c.h.b16 %v263
    %v583 = vunpack.c.l.b16 %v264
    %v584 = vunpack.c.h.b16 %v264
    %v585 = vunpack.c.l.b16 %v265
    %v586 = vunpack.c.h.b16 %v265
    %v587 = vunpack.c.l.b16 %v266
    %v588 = vunpack.c.h.b16 %v266
    %v589 = vunpack.c.l.b16 %v267
    %v590 = vunpack.c.h.b16 %v267
    %v591 = vunpack.c.l.b16 %v268
    %v592 = vunpack.c.h.b16 %v268
    %v593 = vunpack.c.l.b16 %v269
    %v594 = vunpack.c.h.b16 %v269
    %v595 = vunpack.c.l.b16 %v270
    %v596 = vunpack.c.h.b16 %v270
    %v597 = vunpack.c.l.b16 %v271
    %v598 = vunpack.c.h.b16 %v271
    %v599 = vunpack.c.l.b16 %v272
    %v600 = vunpack.c.h.b16 %v272
    %v601 = vunpack.c.l.b16 %v273
    %v602 = vunpack.c.h.b16 %v273
    %v603 = vunpack.c.l.b16 %v274
    %v604 = vunpack.c.h.b16 %v274
    %v605 = vunpack.c.l.b16 %v275
    %v606 = vunpack.c.h.b16 %v275
    %v607 = vunpack.c.l.b16 %v276
    %v608 = vunpack.c.h.b16 %v276
    %v609 = vunpack.c.l.b16 %v277
    %v610 = vunpack.c.h.b16 %v277
    %v611 = vunpack.c.l.b16 %v278
    %v612 = vunpack.c.h.b16 %v278
    %v613 = vunpack.c.l.b16 %v279
    %v614 = vunpack.c.h.b16 %v279
    %v615 = vunpack.c.l.b16 %v280
    %v616 = vunpack.c.h.b16 %v280
    %v617 = vunpack.c.l.b16 %v281
    %v618 = vunpack.c.h.b16 %v281
    %v619 = vunpack.c.l.b16 %v282
    %v620 = vunpack.c.h.b16 %v282
    %v621 = vunpack.c.l.b16 %v283
    %v622 = vunpack.c.h.b16 %v283
    %v623 = vunpack.c.l.b16 %v284
    %v624 = vunpack.c.h.b16 %v284
    %v625 = vunpack.c.l.b16 %v285
    %v626 = vunpack.c.h.b16 %v285
    %v627 = vunpack.c.l.b16 %v286
    %v628 = vunpack.c.h.b16 %v286
    %v629 = vunpack.c.l.b16 %v287
    %v630 = vunpack.c.h.b16 %v287
    %v631 = vunpack.c.l.b16 %v288
    %v632 = vunpack.c.h.b16 %v288
    %v633 = vunpack.c.l.b16 %v289
    %v634 = vunpack.c.h.b16 %v289
    %v635 = vunpack.c.l.b16 %v290
    %v636 = vunpack.c.h.b16 %v290
    %v637 = vunpack.c.l.b16 %v291
    %v638 = vunpack.c.h.b16 %v291
    %v639 = vunpack.c.l.b16 %v292
    %v640 = vunpack.c.h.b16 %v292
    %v641 = vunpack.c.l.b16 %v293
    %v642 = vunpack.c.h.b16 %v293
    %v643 = vunpack.c.l.b16 %v294
    %v644 = vunpack.c.h.b16 %v294
    %v645 = vunpack.c.l.b16 %v295
    %v646 = vunpack.c.h.b16 %v295
    %v647 = vunpack.c.l.b16 %v296
    %v648 = vunpack.c.h.b16 %v296
    %v649 = vunpack.c.l.b16 %v297
    %v650 = vunpack.c.h.b16 %v297
    %v651 = vunpack.c.l.b16 %v298
    %v652 = vunpack.c.h.b16 %v298
    %v653 = vunpack.c.l.b16 %v299
    %v654 = vunpack.c.h.b16 %v299
    %v655 = vunpack.c.l.b16 %v300
    %v656 = vunpack.c.h.b16 %v300
    %v657 = vunpack.c.l.b16 %v301
    %v658 = vunpack.c.h.b16 %v301
    %v659 = vunpack.c.l.b16 %v302
    %v660 = vunpack.c.h.b16 %v302
    %v661 = vunpack.c.l.b16 %v303
    %v662 = vunpack.c.h.b16 %v303
    %v663 = vunpack.c.l.b16 %v304
    %v664 = vunpack.c.h.b16 %v304
    %v665 = vunpack.c.l.b16 %v305
    %v666 = vunpack.c.h.b16 %v305
    %v667 = vunpack.c.l.b16 %v306
    %v668 = vunpack.c.h.b16 %v306
    %v669 = vunpack.c.l.b16 %v307
    %v670 = vunpack.c.h.b16 %v307
    %v671 = vunpack.c.l.b16 %v308
    %v672 = vunpack.c.h.b16 %v308
    %v673 = vunpack.c.l.b16 %v309
    %v674 = vunpack.c.h.b16 %v309
    %v675 = vunpack.c.l.b16 %v310
    %v676 = vunpack.c.h.b16 %v310
    %v677 = vunpack.c.l.b16 %v311
    %v678 = vunpack.c.h.b16 %v311
    %v679 = vunpack.c.l.b16 %v312
    %v680 = vunpack.c.h.b16 %v312
    %v681 = vunpack.c.l.b16 %v313
    %v682 = vunpack.c.h.b16 %v313
    %v683 = vunpack.c.l.b16 %v314
    %v684 = vunpack.c.h.b16 %v314
    %v685 = vunpack.c.l.b16 %v315
    %v686 = vunpack.c.h.b16 %v315
    %v687 = vunpack.c.l.b16 %v316
    %v688 = vunpack.c.h.b16 %v316
    %v689 = vunpack.c.l.b16 %v317
    %v690 = vunpack.c.h.b16 %v317
    %v691 = vunpack.c.l.b16 %v318
    %v692 = vunpack.c.h.b16 %v318
    %v693 = vunpack.c.l.b16 %v319
    %v694 = vunpack.c.h.b16 %v319
    %v695 = vunpack.c.l.b16 %v320
    %v696 = vunpack.c.h.b16 %v320
    %v697 = vunpack.c.l.b16 %v321
    %v698 = vunpack.c.h.b16 %v321
    %v699 = vunpack.c.l.b16 %v322
    %v700 = vunpack.c.h.b16 %v322
    %v701 = vunpack.c.l.b16 %v323
    %v702 = vunpack.c.h.b16 %v323
    %v703 = vunpack.c.l.b16 %v324
    %v704 = vunpack.c.h.b16 %v324
    %v705 = vunpack.c.l.b16 %v325
    %v706 = vunpack.c.h.b16 %v325
    %v707 = vunpack.c.l.b16 %v326
    %v708 = vunpack.c.h.b16 %v326
    %v709 = vunpack.c.l.b16 %v327
    %v710 = vunpack.c.h.b16 %v327
    %v711 = vunpack.c.l.b16 %v328
    %v712 = vunpack.c.h.b16 %v328
    %v713 = vunpack.c.l.b16 %v329
    %v714 = vunpack.c.h.b16 %v329
    %v715 = vunpack.c.l.b16 %v330
    %v716 = vunpack.c.h.b16 %v330
    %v717 = vunpack.c.l.b16 %v331
    %v718 = vunpack.c.h.b16 %v331
    %v719 = vunpack.c.l.b16 %v332
    %v720 = vunpack.c.h.b16 %v332
    %v721 = vunpack.c.l.b16 %v333
    %v722 = vunpack.c.h.b16 %v333
    %v723 = vunpack.c.l.b16 %v334
    %v724 = vunpack.c.h.b16 %v334
    %v725 = vunpack.c.l.b16 %v335
    %v726 = vunpack.c.h.b16 %v335
    %v727 = vunpack.c.l.b16 %v336
    %v728 = vunpack.c.h.b16 %v336
    %v729 = vunpack.c.l.b16 %v337
    %v730 = vunpack.c.h.b16 %v337
    %v731 = vunpack.c.l.b16 %v338
    %v732 = vunpack.c.h.b16 %v338
    %v733 = vpack.c.b16 %v481, %v477
    %v734 = vpack.c.b16 %v482, %v478
    %v735 = vpack.c.b16 %v483, %v479
    %v736 = vpack.c.b16 %v484, %v480
    %v737 = vpack.c.b16 %v489, %v485
    %v738 = vpack.c.b16 %v490, %v486
    %v739 = vpack.c.b16 %v491, %v487
    %v740 = vpack.c.b16 %v492, %v488
    %v741 = vpack.c.b16 %v497, %v493
    %v742 = vpack.c.b16 %v498, %v494
    %v743 = vpack.c.b16 %v499, %v495
    %v744 = vpack.c.b16 %v500, %v496
    %v745 = vpack.c.b16 %v505, %v501
    %v746 = vpack.c.b16 %v506, %v502
    %v747 = vpack.c.b16 %v507, %v503
    %v748 = vpack.c.b16 %v508, %v504
    %v749 = vpack.c.b16 %v513, %v509
    %v750 = vpack.c.b16 %v514, %v510
    %v751 = vpack.c.b16 %v515, %v511
    %v752 = vpack.c.b16 %v516, %v512
    %v753 = vpack.c.b16 %v521, %v517
    %v754 = vpack.c.b16 %v522, %v518
    %v755 = vpack.c.b16 %v523, %v519
    %v756 = vpack.c.b16 %v524, %v520
    %v757 = vpack.c.b16 %v529, %v525
    %v758 = vpack.c.b16 %v530, %v526
    %v759 = vpack.c.b16 %v531, %v527
    %v760 = vpack.c.b16 %v532, %v528
    %v761 = vpack.c.b16 %v537, %v533
    %v762 = vpack.c.b16 %v538, %v534
    %v763 = vpack.c.b16 %v539, %v535
    %v764 = vpack.c.b16 %v540, %v536
    %v765 = vpack.c.b16 %v545, %v541
    %v766 = vpack.c.b16 %v546, %v542
    %v767 = vpack.c.b16 %v547, %v543
    %v768 = vpack.c.b16 %v548, %v544
    %v769 = vpack.c.b16 %v553, %v549
    %v770 = vpack.c.b16 %v554, %v550
    %v771 = vpack.c.b16 %v555, %v551
    %v772 = vpack.c.b16 %v556, %v552
    %v773 = vpack.c.b16 %v561, %v557
    %v774 = vpack.c.b16 %v562, %v558
    %v775 = vpack.c.b16 %v563, %v559
    %v776 = vpack.c.b16 %v564, %v560
    %v777 = vpack.c.b16 %v569, %v565
    %v778 = vpack.c.b16 %v570, %v566
    %v779 = vpack.c.b16 %v571, %v567
    %v780 = vpack.c.b16 %v572, %v568
    %v781 = vpack.c.b16 %v577, %v573
    %v782 = vpack.c.b16 %v578, %v574
    %v783 = vpack.c.b16 %v579, %v575
    %v784 = vpack.c.b16 %v580, %v576
    %v785 = vpack.c.b16 %v585, %v581
    %v786 = vpack.c.b16 %v586, %v582
    %v787 = vpack.c.b16 %v587, %v583
    %v788 = vpack.c.b16 %v588, %v584
    %v789 = vpack.c.b16 %v593, %v589
    %v790 = vpack.c.b16 %v594, %v590
    %v791 = vpack.c.b16 %v595, %v591
    %v792 = vpack.c.b16 %v596, %v592
    %v793 = vpack.c.b16 %v601, %v597
    %v794 = vpack.c.b16 %v602, %v598
    %v795 = vpack.c.b16 %v603, %v599
    %v796 = vpack.c.b16 %v604, %v600
    %v797 = vpack.c.b16 %v609, %v605
    %v798 = vpack.c.b16 %v610, %v606
    %v799 = vpack.c.b16 %v611, %v607
    %v800 = vpack.c.b16 %v612, %v608
    %v801 = vpack.c.b16 %v617, %v613
    %v802 = vpack.c.b16 %v618, %v614
    %v803 = vpack.c.b16 %v619, %v615
    %v804 = vpack.c.b16 %v620, %v616
    %v805 = vpack.c.b16 %v625, %v621
    %v806 = vpack.c.b16 %v626, %v622
    %v807 = vpack.c.b16 %v627, %v623
    %v808 = vpack.c.b16 %v628, %v624
    %v809 = vpack.c.b16 %v633, %v629
    %v810 = vpack.c.b16 %v634, %v630
    %v811 = vpack.c.b16 %v635, %v631
    %v812 = vpack.c.b16 %v636, %v632
    %v813 = vpack.c.b16 %v641, %v637
    %v814 = vpack.c.b16 %v642, %v638
    %v815 = vpack.c.b16 %v643, %v639
    %v816 = vpack.c.b16 %v644, %v640
    %v817 = vpack.c.b16 %v649, %v645
    %v818 = vpack.c.b16 %v650, %v646
    %v819 = vpack.c.b16 %v651, %v647
    %v820 = vpack.c.b16 %v652, %v648
    %v821 = vpack.c.b16 %v657, %v653
    %v822 = vpack.c.b16 %v658, %v654
    %v823 = vpack.c.b16 %v659, %v655
    %v824 = vpack.c.b16 %v660, %v656
    %v825 = vpack.c.b16 %v665, %v661
    %v826 = vpack.c.b16 %v666, %v662
    %v827 = vpack.c.b16 %v667, %v663
    %v828 = vpack.c.b16 %v668, %v664
    %v829 = vpack.c.b16 %v673, %v669
    %v830 = vpack.c.b16 %v674, %v670
    %v831 = vpack.c.b16 %v675, %v671
    %v832 = vpack.c.b16 %v676, %v672
    %v833 = vpack.c.b16 %v681, %v677
    %v834 = vpack.c.b16 %v682, %v678
    %v835 = vpack.c.b16 %v683, %v679
    %v836 = vpack.c.b16 %v684, %v680
    %v837 = vpack.c.b16 %v689, %v685
    %v838 = vpack.c.b16 %v690, %v686
    %v839 = vpack.c.b16 %v691, %v687
    %v840 = vpack.c.b16 %v692, %v688
    %v841 = vpack.c.b16 %v697, %v693
    %v842 = vpack.c.b16 %v698, %v694
    %v843 = vpack.c.b16 %v699, %v695
    %v844 = vpack.c.b16 %v700, %v696
    %v845 = vpack.c.b16 %v705, %v701
    %v846 = vpack.c.b16 %v706, %v702
    %v847 = vpack.c.b16 %v707, %v703
    %v848 = vpack.c.b16 %v708, %v704
    %v849 = vpack.c.b16 %v713, %v709
    %v850 = vpack.c.b16 %v714, %v710
    %v851 = vpack.c.b16 %v715, %v711
    %v852 = vpack.c.b16 %v716, %v712
    %v853 = vpack.c.b16 %v721, %v717
    %v854 = vpack.c.b16 %v722, %v718
    %v855 = vpack.c.b16 %v723, %v719
    %v856 = vpack.c.b16 %v724, %v720
    %v857 = vpack.c.b16 %v729, %v725
    %v858 = vpack.c.b16 %v730, %v726
    %v859 = vpack.c.b16 %v731, %v727
    %v860 = vpack.c.b16 %v732, %v728
    %989 = vmatpush.bf16.msra.mxu0 %v761
    %990 = vmatpush.bf16.msra.mxu0 %v757
    %991 = vmatpush.bf16.msra.mxu0 %v753
    %992 = vmatpush.bf16.msra.mxu0 %v749
    %993 = vmatpush.bf16.msra.mxu0 %v745
    %994 = vmatpush.bf16.msra.mxu0 %v741
    %995 = vmatpush.bf16.msra.mxu0 %v737
    %996 = vmatpush.bf16.msra.mxu0 %v733
    %997 = vmatmul.bf16.gmra.mxu0 %v207
    %v998 = vpop.f32.mrf.mxu0
    %v999 = vadd.f32 %v341, %v998
    %v1000 = vpop.f32.mrf.mxu0
    %v1001 = vadd.f32 %v341, %v1000
    %1002 = vdwg.mxu0
    %1003 = vmatpush.bf16.msra.mxu0 %v793
    %1004 = vmatpush.bf16.msra.mxu0 %v789
    %1005 = vmatpush.bf16.msra.mxu0 %v785
    %1006 = vmatpush.bf16.msra.mxu0 %v781
    %1007 = vmatpush.bf16.msra.mxu0 %v777
    %1008 = vmatpush.bf16.msra.mxu0 %v773
    %1009 = vmatpush.bf16.msra.mxu0 %v769
    %1010 = vmatpush.bf16.msra.mxu0 %v765
    %1011 = vmatmul.bf16.gmra.mxu0 %v208
    %v1012 = vpop.f32.mrf.mxu0
    %v1013 = vadd.f32 %v999, %v1012
    %v1014 = vpop.f32.mrf.mxu0
    %v1015 = vadd.f32 %v1001, %v1014
    %1016 = vdwg.mxu0
    %1017 = vmatpush.bf16.msra.mxu0 %v825
    %1018 = vmatpush.bf16.msra.mxu0 %v821
    %1019 = vmatpush.bf16.msra.mxu0 %v817
    %1020 = vmatpush.bf16.msra.mxu0 %v813
    %1021 = vmatpush.bf16.msra.mxu0 %v809
    %1022 = vmatpush.bf16.msra.mxu0 %v805
    %1023 = vmatpush.bf16.msra.mxu0 %v801
    %1024 = vmatpush.bf16.msra.mxu0 %v797
    %1025 = vmatmul.bf16.gmra.mxu0 %v209
    %v1026 = vpop.f32.mrf.mxu0
    %v1027 = vadd.f32 %v1013, %v1026
    %v1028 = vpop.f32.mrf.mxu0
    %v1029 = vadd.f32 %v1015, %v1028
    %1030 = vdwg.mxu0
    %1031 = vmatpush.bf16.msra.mxu0 %v857
    %1032 = vmatpush.bf16.msra.mxu0 %v853
    %1033 = vmatpush.bf16.msra.mxu0 %v849
    %1034 = vmatpush.bf16.msra.mxu0 %v845
    %1035 = vmatpush.bf16.msra.mxu0 %v841
    %1036 = vmatpush.bf16.msra.mxu0 %v837
    %1037 = vmatpush.bf16.msra.mxu0 %v833
    %1038 = vmatpush.bf16.msra.mxu0 %v829
    %1039 = vmatmul.bf16.gmra.mxu0 %v210
    %v1040 = vpop.f32.mrf.mxu0
    %v1041 = vadd.f32 %v1027, %v1040
    %v1042 = vpop.f32.mrf.mxu0
    %v1043 = vadd.f32 %v1029, %v1042
    %1044 = vdwg.mxu0
    %1045 = vmatpush.bf16.msra.mxu0 %v762
    %1046 = vmatpush.bf16.msra.mxu0 %v758
    %1047 = vmatpush.bf16.msra.mxu0 %v754
    %1048 = vmatpush.bf16.msra.mxu0 %v750
    %1049 = vmatpush.bf16.msra.mxu0 %v746
    %1050 = vmatpush.bf16.msra.mxu0 %v742
    %1051 = vmatpush.bf16.msra.mxu0 %v738
    %1052 = vmatpush.bf16.msra.mxu0 %v734
    %1053 = vmatmul.bf16.gmra.mxu0 %v207
    %v1054 = vpop.f32.mrf.mxu0
    %v1055 = vadd.f32 %v342, %v1054
    %v1056 = vpop.f32.mrf.mxu0
    %v1057 = vadd.f32 %v342, %v1056
    %1058 = vdwg.mxu0
    %1059 = vmatpush.bf16.msra.mxu0 %v794
    %1060 = vmatpush.bf16.msra.mxu0 %v790
    %1061 = vmatpush.bf16.msra.mxu0 %v786
    %1062 = vmatpush.bf16.msra.mxu0 %v782
    %1063 = vmatpush.bf16.msra.mxu0 %v778
    %1064 = vmatpush.bf16.msra.mxu0 %v774
    %1065 = vmatpush.bf16.msra.mxu0 %v770
    %1066 = vmatpush.bf16.msra.mxu0 %v766
    %1067 = vmatmul.bf16.gmra.mxu0 %v208
    %v1068 = vpop.f32.mrf.mxu0
    %v1069 = vadd.f32 %v1055, %v1068
    %v1070 = vpop.f32.mrf.mxu0
    %v1071 = vadd.f32 %v1057, %v1070
    %1072 = vdwg.mxu0
    %1073 = vmatpush.bf16.msra.mxu0 %v826
    %1074 = vmatpush.bf16.msra.mxu0 %v822
    %1075 = vmatpush.bf16.msra.mxu0 %v818
    %1076 = vmatpush.bf16.msra.mxu0 %v814
    %1077 = vmatpush.bf16.msra.mxu0 %v810
    %1078 = vmatpush.bf16.msra.mxu0 %v806
    %1079 = vmatpush.bf16.msra.mxu0 %v802
    %1080 = vmatpush.bf16.msra.mxu0 %v798
    %1081 = vmatmul.bf16.gmra.mxu0 %v209
    %v1082 = vpop.f32.mrf.mxu0
    %v1083 = vadd.f32 %v1069, %v1082
    %v1084 = vpop.f32.mrf.mxu0
    %v1085 = vadd.f32 %v1071, %v1084
    %1086 = vdwg.mxu0
    %1087 = vmatpush.bf16.msra.mxu0 %v858
    %1088 = vmatpush.bf16.msra.mxu0 %v854
    %1089 = vmatpush.bf16.msra.mxu0 %v850
    %1090 = vmatpush.bf16.msra.mxu0 %v846
    %1091 = vmatpush.bf16.msra.mxu0 %v842
    %1092 = vmatpush.bf16.msra.mxu0 %v838
    %1093 = vmatpush.bf16.msra.mxu0 %v834
    %1094 = vmatpush.bf16.msra.mxu0 %v830
    %1095 = vmatmul.bf16.gmra.mxu0 %v210
    %v1096 = vpop.f32.mrf.mxu0
    %v1097 = vadd.f32 %v1083, %v1096
    %v1098 = vpop.f32.mrf.mxu0
    %v1099 = vadd.f32 %v1085, %v1098
    %1100 = vdwg.mxu0
    %1101 = vmatpush.bf16.msra.mxu0 %v763
    %1102 = vmatpush.bf16.msra.mxu0 %v759
    %1103 = vmatpush.bf16.msra.mxu0 %v755
    %1104 = vmatpush.bf16.msra.mxu0 %v751
    %1105 = vmatpush.bf16.msra.mxu0 %v747
    %1106 = vmatpush.bf16.msra.mxu0 %v743
    %1107 = vmatpush.bf16.msra.mxu0 %v739
    %1108 = vmatpush.bf16.msra.mxu0 %v735
    %1109 = vmatmul.bf16.gmra.mxu0 %v207
    %v1110 = vpop.f32.mrf.mxu0
    %v1111 = vadd.f32 %v343, %v1110
    %v1112 = vpop.f32.mrf.mxu0
    %v1113 = vadd.f32 %v343, %v1112
    %1114 = vdwg.mxu0
    %1115 = vmatpush.bf16.msra.mxu0 %v795
    %1116 = vmatpush.bf16.msra.mxu0 %v791
    %1117 = vmatpush.bf16.msra.mxu0 %v787
    %1118 = vmatpush.bf16.msra.mxu0 %v783
    %1119 = vmatpush.bf16.msra.mxu0 %v779
    %1120 = vmatpush.bf16.msra.mxu0 %v775
    %1121 = vmatpush.bf16.msra.mxu0 %v771
    %1122 = vmatpush.bf16.msra.mxu0 %v767
    %1123 = vmatmul.bf16.gmra.mxu0 %v208
    %v1124 = vpop.f32.mrf.mxu0
    %v1125 = vadd.f32 %v1111, %v1124
    %v1126 = vpop.f32.mrf.mxu0
    %v1127 = vadd.f32 %v1113, %v1126
    %1128 = vdwg.mxu0
    %1129 = vmatpush.bf16.msra.mxu0 %v827
    %1130 = vmatpush.bf16.msra.mxu0 %v823
    %1131 = vmatpush.bf16.msra.mxu0 %v819
    %1132 = vmatpush.bf16.msra.mxu0 %v815
    %1133 = vmatpush.bf16.msra.mxu0 %v811
    %1134 = vmatpush.bf16.msra.mxu0 %v807
    %1135 = vmatpush.bf16.msra.mxu0 %v803
    %1136 = vmatpush.bf16.msra.mxu0 %v799
    %1137 = vmatmul.bf16.gmra.mxu0 %v209
    %v1138 = vpop.f32.mrf.mxu0
    %v1139 = vadd.f32 %v1125, %v1138
    %v1140 = vpop.f32.mrf.mxu0
    %v1141 = vadd.f32 %v1127, %v1140
    %1142 = vdwg.mxu0
    %1143 = vmatpush.bf16.msra.mxu0 %v859
    %1144 = vmatpush.bf16.msra.mxu0 %v855
    %1145 = vmatpush.bf16.msra.mxu0 %v851
    %1146 = vmatpush.bf16.msra.mxu0 %v847
    %1147 = vmatpush.bf16.msra.mxu0 %v843
    %1148 = vmatpush.bf16.msra.mxu0 %v839
    %1149 = vmatpush.bf16.msra.mxu0 %v835
    %1150 = vmatpush.bf16.msra.mxu0 %v831
    %1151 = vmatmul.bf16.gmra.mxu0 %v210
    %v1152 = vpop.f32.mrf.mxu0
    %v1153 = vadd.f32 %v1139, %v1152
    %v1154 = vpop.f32.mrf.mxu0
    %v1155 = vadd.f32 %v1141, %v1154
    %1156 = vdwg.mxu0
    %1157 = vmatpush.bf16.msra.mxu0 %v764
    %1158 = vmatpush.bf16.msra.mxu0 %v760
    %1159 = vmatpush.bf16.msra.mxu0 %v756
    %1160 = vmatpush.bf16.msra.mxu0 %v752
    %1161 = vmatpush.bf16.msra.mxu0 %v748
    %1162 = vmatpush.bf16.msra.mxu0 %v744
    %1163 = vmatpush.bf16.msra.mxu0 %v740
    %1164 = vmatpush.bf16.msra.mxu0 %v736
    %1165 = vmatmul.bf16.gmra.mxu0 %v207
    %v1166 = vpop.f32.mrf.mxu0
    %v1167 = vadd.f32 %v344, %v1166
    %v1168 = vpop.f32.mrf.mxu0
    %v1169 = vadd.f32 %v344, %v1168
    %1170 = vdwg.mxu0
    %1171 = vmatpush.bf16.msra.mxu0 %v796
    %1172 = vmatpush.bf16.msra.mxu0 %v792
    %1173 = vmatpush.bf16.msra.mxu0 %v788
    %1174 = vmatpush.bf16.msra.mxu0 %v784
    %1175 = vmatpush.bf16.msra.mxu0 %v780
    %1176 = vmatpush.bf16.msra.mxu0 %v776
    %1177 = vmatpush.bf16.msra.mxu0 %v772
    %1178 = vmatpush.bf16.msra.mxu0 %v768
    %1179 = vmatmul.bf16.gmra.mxu0 %v208
    %v1180 = vpop.f32.mrf.mxu0
    %v1181 = vadd.f32 %v1167, %v1180
    %v1182 = vpop.f32.mrf.mxu0
    %v1183 = vadd.f32 %v1169, %v1182
    %1184 = vdwg.mxu0
    %1185 = vmatpush.bf16.msra.mxu0 %v828
    %1186 = vmatpush.bf16.msra.mxu0 %v824
    %1187 = vmatpush.bf16.msra.mxu0 %v820
    %1188 = vmatpush.bf16.msra.mxu0 %v816
    %1189 = vmatpush.bf16.msra.mxu0 %v812
    %1190 = vmatpush.bf16.msra.mxu0 %v808
    %1191 = vmatpush.bf16.msra.mxu0 %v804
    %1192 = vmatpush.bf16.msra.mxu0 %v800
    %1193 = vmatmul.bf16.gmra.mxu0 %v209
    %v1194 = vpop.f32.mrf.mxu0
    %v1195 = vadd.f32 %v1181, %v1194
    %v1196 = vpop.f32.mrf.mxu0
    %v1197 = vadd.f32 %v1183, %v1196
    %1198 = vdwg.mxu0
    %1199 = vmatpush.bf16.msra.mxu0 %v860
    %1200 = vmatpush.bf16.msra.mxu0 %v856
    %1201 = vmatpush.bf16.msra.mxu0 %v852
    %1202 = vmatpush.bf16.msra.mxu0 %v848
    %1203 = vmatpush.bf16.msra.mxu0 %v844
    %1204 = vmatpush.bf16.msra.mxu0 %v840
    %1205 = vmatpush.bf16.msra.mxu0 %v836
    %1206 = vmatpush.bf16.msra.mxu0 %v832
    %1207 = vmatmul.bf16.gmra.mxu0 %v210
    %v1208 = vpop.f32.mrf.mxu0
    %v1209 = vadd.f32 %v1195, %v1208
    %v1210 = vpop.f32.mrf.mxu0
    %v1211 = vadd.f32 %v1197, %v1210
    %1212 = vdwg.mxu0
    %v1213 = vmax.f32 %v1041, 0.0
    %v1214 = vmax.f32 %v1097, 0.0
    %v1215 = vmax.f32 %v1153, 0.0
    %v1216 = vmax.f32 %v1209, 0.0
    %v1217 = vmax.f32 %v1043, 0.0
    %v1218 = vmax.f32 %v1099, 0.0
    %v1219 = vmax.f32 %v1155, 0.0
    %v1220 = vmax.f32 %v1211, 0.0
    %v1221 = vpack.c.bf16 %v1217, %v1213
    %v1222 = vpack.c.bf16 %v1218, %v1214
    %v1223 = vpack.c.bf16 %v1219, %v1215
    %v1224 = vpack.c.bf16 %v1220, %v1216
    %v1225 = vld [vmem:[#allocation6] sm:$0xf]
    %v1226 = vld [vmem:[#allocation6 + $0x4] sm:$0xf]
    %v1227 = vld [vmem:[#allocation6 + $0x8] sm:$0xf]
    %v1228 = vld [vmem:[#allocation6 + $0xc] sm:$0xf]
    %v1229 = vld [vmem:[#allocation6 + $0x10] sm:$0xf]
    %v1230 = vld [vmem:[#allocation6 + $0x14] sm:$0xf]
    %v1231 = vld [vmem:[#allocation6 + $0x18] sm:$0xf]
    %v1232 = vld [vmem:[#allocation6 + $0x1c] sm:$0xf]
    %v1233 = vld [vmem:[#allocation6 + $0x20] sm:$0xf]
    %v1234 = vld [vmem:[#allocation6 + $0x24] sm:$0xf]
    %v1235 = vld [vmem:[#allocation6 + $0x28] sm:$0xf]
    %v1236 = vld [vmem:[#allocation6 + $0x2c] sm:$0xf]
    %v1237 = vld [vmem:[#allocation6 + $0x30] sm:$0xf]
    %v1238 = vld [vmem:[#allocation6 + $0x34] sm:$0xf]
    %v1239 = vld [vmem:[#allocation6 + $0x38] sm:$0xf]
    %v1240 = vld [vmem:[#allocation6 + $0x3c] sm:$0xf]
    %v1241 = vld [vmem:[#allocation6 + $0x40] sm:$0xf]
    %v1242 = vld [vmem:[#allocation6 + $0x44] sm:$0xf]
    %v1243 = vld [vmem:[#allocation6 + $0x48] sm:$0xf]
    %v1244 = vld [vmem:[#allocation6 + $0x4c] sm:$0xf]
    %v1245 = vld [vmem:[#allocation6 + $0x50] sm:$0xf]
    %v1246 = vld [vmem:[#allocation6 + $0x54] sm:$0xf]
    %v1247 = vld [vmem:[#allocation6 + $0x58] sm:$0xf]
    %v1248 = vld [vmem:[#allocation6 + $0x5c] sm:$0xf]
    %v1249 = vld [vmem:[#allocation6 + $0x60] sm:$0xf]
    %v1250 = vld [vmem:[#allocation6 + $0x64] sm:$0xf]
    %v1251 = vld [vmem:[#allocation6 + $0x68] sm:$0xf]
    %v1252 = vld [vmem:[#allocation6 + $0x6c] sm:$0xf]
    %v1253 = vld [vmem:[#allocation6 + $0x70] sm:$0xf]
    %v1254 = vld [vmem:[#allocation6 + $0x74] sm:$0xf]
    %v1255 = vld [vmem:[#allocation6 + $0x78] sm:$0xf]
    %v1256 = vld [vmem:[#allocation6 + $0x7c] sm:$0xf]
    %v1257 = vld [vmem:[#allocation6 + $0x80] sm:$0xf]
    %v1258 = vld [vmem:[#allocation6 + $0x84] sm:$0xf]
    %v1259 = vld [vmem:[#allocation6 + $0x88] sm:$0xf]
    %v1260 = vld [vmem:[#allocation6 + $0x8c] sm:$0xf]
    %v1261 = vld [vmem:[#allocation6 + $0x90] sm:$0xf]
    %v1262 = vld [vmem:[#allocation6 + $0x94] sm:$0xf]
    %v1263 = vld [vmem:[#allocation6 + $0x98] sm:$0xf]
    %v1264 = vld [vmem:[#allocation6 + $0x9c] sm:$0xf]
    %v1265 = vld [vmem:[#allocation6 + $0xa0] sm:$0xf]
    %v1266 = vld [vmem:[#allocation6 + $0xa4] sm:$0xf]
    %v1267 = vld [vmem:[#allocation6 + $0xa8] sm:$0xf]
    %v1268 = vld [vmem:[#allocation6 + $0xac] sm:$0xf]
    %v1269 = vld [vmem:[#allocation6 + $0xb0] sm:$0xf]
    %v1270 = vld [vmem:[#allocation6 + $0xb4] sm:$0xf]
    %v1271 = vld [vmem:[#allocation6 + $0xb8] sm:$0xf]
    %v1272 = vld [vmem:[#allocation6 + $0xbc] sm:$0xf]
    %v1273 = vld [vmem:[#allocation6 + $0xc0] sm:$0xf]
    %v1274 = vld [vmem:[#allocation6 + $0xc4] sm:$0xf]
    %v1275 = vld [vmem:[#allocation6 + $0xc8] sm:$0xf]
    %v1276 = vld [vmem:[#allocation6 + $0xcc] sm:$0xf]
    %v1277 = vld [vmem:[#allocation6 + $0xd0] sm:$0xf]
    %v1278 = vld [vmem:[#allocation6 + $0xd4] sm:$0xf]
    %v1279 = vld [vmem:[#allocation6 + $0xd8] sm:$0xf]
    %v1280 = vld [vmem:[#allocation6 + $0xdc] sm:$0xf]
    %v1281 = vld [vmem:[#allocation6 + $0xe0] sm:$0xf]
    %v1282 = vld [vmem:[#allocation6 + $0xe4] sm:$0xf]
    %v1283 = vld [vmem:[#allocation6 + $0xe8] sm:$0xf]
    %v1284 = vld [vmem:[#allocation6 + $0xec] sm:$0xf]
    %v1285 = vld [vmem:[#allocation6 + $0xf0] sm:$0xf]
    %v1286 = vld [vmem:[#allocation6 + $0xf4] sm:$0xf]
    %v1287 = vld [vmem:[#allocation6 + $0xf8] sm:$0xf]
    %v1288 = vld [vmem:[#allocation6 + $0xfc] sm:$0xf]
    %v1289 = vld [vmem:[%s6] sm:$0x1]
    %v1291 = vperm.slane %v1289, 0
    %v1357 = vunpack.c.l.b16 %v1225
    %v1358 = vunpack.c.l.b16 %v1226
    %v1359 = vunpack.c.l.b16 %v1227
    %v1360 = vunpack.c.l.b16 %v1228
    %v1361 = vunpack.c.l.b16 %v1229
    %v1362 = vunpack.c.l.b16 %v1230
    %v1363 = vunpack.c.l.b16 %v1231
    %v1364 = vunpack.c.l.b16 %v1232
    %v1365 = vunpack.c.l.b16 %v1233
    %v1366 = vunpack.c.l.b16 %v1234
    %v1367 = vunpack.c.l.b16 %v1235
    %v1368 = vunpack.c.l.b16 %v1236
    %v1369 = vunpack.c.l.b16 %v1237
    %v1370 = vunpack.c.l.b16 %v1238
    %v1371 = vunpack.c.l.b16 %v1239
    %v1372 = vunpack.c.l.b16 %v1240
    %v1373 = vunpack.c.l.b16 %v1241
    %v1374 = vunpack.c.l.b16 %v1242
    %v1375 = vunpack.c.l.b16 %v1243
    %v1376 = vunpack.c.l.b16 %v1244
    %v1377 = vunpack.c.l.b16 %v1245
    %v1378 = vunpack.c.l.b16 %v1246
    %v1379 = vunpack.c.l.b16 %v1247
    %v1380 = vunpack.c.l.b16 %v1248
    %v1381 = vunpack.c.l.b16 %v1249
    %v1382 = vunpack.c.l.b16 %v1250
    %v1383 = vunpack.c.l.b16 %v1251
    %v1384 = vunpack.c.l.b16 %v1252
    %v1385 = vunpack.c.l.b16 %v1253
    %v1386 = vunpack.c.l.b16 %v1254
    %v1387 = vunpack.c.l.b16 %v1255
    %v1388 = vunpack.c.l.b16 %v1256
    %v1389 = vunpack.c.l.b16 %v1257
    %v1390 = vunpack.c.l.b16 %v1258
    %v1391 = vunpack.c.l.b16 %v1259
    %v1392 = vunpack.c.l.b16 %v1260
    %v1393 = vunpack.c.l.b16 %v1261
    %v1394 = vunpack.c.l.b16 %v1262
    %v1395 = vunpack.c.l.b16 %v1263
    %v1396 = vunpack.c.l.b16 %v1264
    %v1397 = vunpack.c.l.b16 %v1265
    %v1398 = vunpack.c.l.b16 %v1266
    %v1399 = vunpack.c.l.b16 %v1267
    %v1400 = vunpack.c.l.b16 %v1268
    %v1401 = vunpack.c.l.b16 %v1269
    %v1402 = vunpack.c.l.b16 %v1270
    %v1403 = vunpack.c.l.b16 %v1271
    %v1404 = vunpack.c.l.b16 %v1272
    %v1405 = vunpack.c.l.b16 %v1273
    %v1406 = vunpack.c.l.b16 %v1274
    %v1407 = vunpack.c.l.b16 %v1275
    %v1408 = vunpack.c.l.b16 %v1276
    %v1409 = vunpack.c.l.b16 %v1277
    %v1410 = vunpack.c.l.b16 %v1278
    %v1411 = vunpack.c.l.b16 %v1279
    %v1412 = vunpack.c.l.b16 %v1280
    %v1413 = vunpack.c.l.b16 %v1281
    %v1414 = vunpack.c.l.b16 %v1282
    %v1415 = vunpack.c.l.b16 %v1283
    %v1416 = vunpack.c.l.b16 %v1284
    %v1417 = vunpack.c.l.b16 %v1285
    %v1418 = vunpack.c.l.b16 %v1286
    %v1419 = vunpack.c.l.b16 %v1287
    %v1420 = vunpack.c.l.b16 %v1288
    %v1421 = vpack.c.b16 %v1358, %v1357
    %v1422 = vpack.c.b16 %v1360, %v1359
    %v1423 = vpack.c.b16 %v1362, %v1361
    %v1424 = vpack.c.b16 %v1364, %v1363
    %v1425 = vpack.c.b16 %v1366, %v1365
    %v1426 = vpack.c.b16 %v1368, %v1367
    %v1427 = vpack.c.b16 %v1370, %v1369
    %v1428 = vpack.c.b16 %v1372, %v1371
    %v1429 = vpack.c.b16 %v1374, %v1373
    %v1430 = vpack.c.b16 %v1376, %v1375
    %v1431 = vpack.c.b16 %v1378, %v1377
    %v1432 = vpack.c.b16 %v1380, %v1379
    %v1433 = vpack.c.b16 %v1382, %v1381
    %v1434 = vpack.c.b16 %v1384, %v1383
    %v1435 = vpack.c.b16 %v1386, %v1385
    %v1436 = vpack.c.b16 %v1388, %v1387
    %v1437 = vpack.c.b16 %v1390, %v1389
    %v1438 = vpack.c.b16 %v1392, %v1391
    %v1439 = vpack.c.b16 %v1394, %v1393
    %v1440 = vpack.c.b16 %v1396, %v1395
    %v1441 = vpack.c.b16 %v1398, %v1397
    %v1442 = vpack.c.b16 %v1400, %v1399
    %v1443 = vpack.c.b16 %v1402, %v1401
    %v1444 = vpack.c.b16 %v1404, %v1403
    %v1445 = vpack.c.b16 %v1406, %v1405
    %v1446 = vpack.c.b16 %v1408, %v1407
    %v1447 = vpack.c.b16 %v1410, %v1409
    %v1448 = vpack.c.b16 %v1412, %v1411
    %v1449 = vpack.c.b16 %v1414, %v1413
    %v1450 = vpack.c.b16 %v1416, %v1415
    %v1451 = vpack.c.b16 %v1418, %v1417
    %v1452 = vpack.c.b16 %v1420, %v1419
    %1485 = vmatpush.bf16.msra.mxu0 %v1428
    %1486 = vmatpush.bf16.msra.mxu0 %v1427
    %1487 = vmatpush.bf16.msra.mxu0 %v1426
    %1488 = vmatpush.bf16.msra.mxu0 %v1425
    %1489 = vmatpush.bf16.msra.mxu0 %v1424
    %1490 = vmatpush.bf16.msra.mxu0 %v1423
    %1491 = vmatpush.bf16.msra.mxu0 %v1422
    %1492 = vmatpush.bf16.msra.mxu0 %v1421
    %1493 = vmatmul.bf16.gmra.mxu0 %v1221
    %v1494 = vpop.f32.mrf.mxu0
    %v1495 = vadd.f32 %v1291, %v1494
    %v1496 = vpop.f32.mrf.mxu0
    %v1497 = vadd.f32 %v1291, %v1496
    %1498 = vdwg.mxu0
    %1499 = vmatpush.bf16.msra.mxu0 %v1436
    %1500 = vmatpush.bf16.msra.mxu0 %v1435
    %1501 = vmatpush.bf16.msra.mxu0 %v1434
    %1502 = vmatpush.bf16.msra.mxu0 %v1433
    %1503 = vmatpush.bf16.msra.mxu0 %v1432
    %1504 = vmatpush.bf16.msra.mxu0 %v1431
    %1505 = vmatpush.bf16.msra.mxu0 %v1430
    %1506 = vmatpush.bf16.msra.mxu0 %v1429
    %1507 = vmatmul.bf16.gmra.mxu0 %v1222
    %v1508 = vpop.f32.mrf.mxu0
    %v1509 = vadd.f32 %v1495, %v1508
    %v1510 = vpop.f32.mrf.mxu0
    %v1511 = vadd.f32 %v1497, %v1510
    %1512 = vdwg.mxu0
    %1513 = vmatpush.bf16.msra.mxu0 %v1444
    %1514 = vmatpush.bf16.msra.mxu0 %v1443
    %1515 = vmatpush.bf16.msra.mxu0 %v1442
    %1516 = vmatpush.bf16.msra.mxu0 %v1441
    %1517 = vmatpush.bf16.msra.mxu0 %v1440
    %1518 = vmatpush.bf16.msra.mxu0 %v1439
    %1519 = vmatpush.bf16.msra.mxu0 %v1438
    %1520 = vmatpush.bf16.msra.mxu0 %v1437
    %1521 = vmatmul.bf16.gmra.mxu0 %v1223
    %v1522 = vpop.f32.mrf.mxu0
    %v1523 = vadd.f32 %v1509, %v1522
    %v1524 = vpop.f32.mrf.mxu0
    %v1525 = vadd.f32 %v1511, %v1524
    %1526 = vdwg.mxu0
    %1527 = vmatpush.bf16.msra.mxu0 %v1452
    %1528 = vmatpush.bf16.msra.mxu0 %v1451
    %1529 = vmatpush.bf16.msra.mxu0 %v1450
    %1530 = vmatpush.bf16.msra.mxu0 %v1449
    %1531 = vmatpush.bf16.msra.mxu0 %v1448
    %1532 = vmatpush.bf16.msra.mxu0 %v1447
    %1533 = vmatpush.bf16.msra.mxu0 %v1446
    %1534 = vmatpush.bf16.msra.mxu0 %v1445
    %1535 = vmatmul.bf16.gmra.mxu0 %v1224
    %v1536 = vpop.f32.mrf.mxu0
    %v1537 = vadd.f32 %v1523, %v1536
    %v1538 = vpop.f32.mrf.mxu0
    %v1539 = vadd.f32 %v1525, %v1538
    %1540 = vdwg.mxu0
    %1541 = vst [vmem:[%s7] sm:$0xff] %v1537
    %1542 = vst [vmem:[%s7 + $0x8] sm:$0xff] %v1539
    // Predicated region
    $region42: #{qnetwork_forward.1} parent=1 // pred_check
      _
    $region43: #{qnetwork_forward.1} parent=1 // pred_check_branch
      %1544 = sbr.rel (0) target = $region45
    $region44: #{qnetwork_forward.1} parent=1 // pred_region
      _
    $region45: #{qnetwork_forward.1} parent=1 // pred_fallthru
      _
    // Predicated region
    $region46: #{qnetwork_forward.1} parent=1 // pred_check
      _
    $region47: #{qnetwork_forward.1} parent=1 // pred_check_branch
      %1546 = sbr.rel (0) target = $region49
    $region48: #{qnetwork_forward.1} parent=1 // pred_region
      _
    $region49: #{qnetwork_forward.1} parent=1 // pred_fallthru
      _
    %1547 = vsyncpa [#allocation3], 1
    %1548 = vsyncpa [#allocation5], 1

</llo_original>
